<compile_context>
chip_gen: v6e
topology: v6e:2x2x1
jax: 0.10.0
libtpu: 0.0.40
codegen_flags: <defaults>
</compile_context>

<pallas_src>
import functools

import jax
import jax.numpy as jnp
from jax.experimental import pallas as pl
from jax.experimental.pallas import tpu as pltpu

LANE = 128      # vreg lane width
SUBLANE = 8     # vreg sublane count (f32)


def _round_up(x, m):
    return ((x + m - 1) // m) * m


def _vmem_capacity_bytes():
    """Per-TensorCore VMEM capacity; conservative default if query fails."""
    try:
        return int(pltpu.get_tpu_info().vmem_capacity_bytes)
    except Exception:
        return 64 << 20   # v7x per-TC VMEM (smallest current generation)


def _pick_tm(m, row_bytes, budget_bytes):
    """Batch tile: as large as the streamed-tile budget allows, preferring
    >= 2 grid steps so v7x's two TensorCores both get work."""
    for tm in (512, 256, 128):
        if m >= 2 * tm and tm * row_bytes <= budget_bytes:
            return tm
    if m >= LANE:
        return LANE
    return _round_up(max(m, 1), SUBLANE)


def _pick_kn_tile(dim, pref=256):
    """K/N tile: 256 fills the v6e/v7x 2x256^2 MXU, 128 is optimal on v5e
    and correct everywhere; fall back to the full dim when not 128-aligned."""
    if dim >= pref and dim % pref == 0:
        return pref
    if dim % LANE == 0:
        return LANE
    return dim


# ----------------------------------------------------------------------------
# Fused path: whole MLP in one pallas_call, weights VMEM-resident.
# ----------------------------------------------------------------------------
def _mlp_fused_kernel(x_ref, *refs, num_layers):
    # refs = (w0, b0, w1, b1, ..., w_{L-1}, b_{L-1}, o_ref)
    o_ref = refs[-1]
    h = x_ref[...]
    for i in range(num_layers):
        wt = refs[2 * i][...]
        b = refs[2 * i + 1][...]
        h = jnp.dot(h, wt, preferred_element_type=jnp.float32) + b
        if i != num_layers - 1:
            h = jnp.maximum(h, 0.0)          # ReLU on all but the last layer
    o_ref[...] = h.astype(o_ref.dtype)


def _mlp_forward_fused(x, padded_params, out_features):
    M, K = x.shape
    num_layers = len(padded_params)
    n_last_p = padded_params[-1][0].shape[1]
    max_np = max(wt.shape[1] for wt, _ in padded_params)

    vmem_cap = _vmem_capacity_bytes()
    weight_bytes = 4 * sum(wt.size + b.size for wt, b in padded_params)  # 1x: Buffered(1)

    # Streamed bytes per batch row: double-buffered x/out tiles + intermediates.
    row_bytes = 4 * (2 * (K + n_last_p) + 2 * max_np)
    budget = max(0, int(0.6 * vmem_cap) - weight_bytes)
    tm = _pick_tm(M, row_bytes, budget)
    mp = _round_up(M, tm)
    xp = x if mp == M else jnp.zeros((mp, K), x.dtype).at[:M, :].set(x)

    grid = (mp // tm,)

    in_specs = [pl.BlockSpec((tm, K), lambda i: (i, 0))]
    flat_inputs = [xp]
    for wt, b in padded_params:
        kp, np_ = wt.shape
        # Constant index_map -> resident; single-buffer (no prefetch benefit).
        in_specs.append(pl.BlockSpec((kp, np_), lambda i: (0, 0),
                                     pipeline_mode=pl.Buffered(1)))
        in_specs.append(pl.BlockSpec((1, np_), lambda i: (0, 0),
                                     pipeline_mode=pl.Buffered(1)))
        flat_inputs.append(wt)
        flat_inputs.append(b)

    out_specs = pl.BlockSpec((tm, n_last_p), lambda i: (i, 0))

    # VMEM budget: 1x weights + double-buffered x/out tiles + intermediate h.
    stream_bytes = 2 * tm * (K + n_last_p) * 4
    act_bytes = 2 * tm * max_np * 4
    vmem_need = weight_bytes + stream_bytes + act_bytes
    vmem_limit = int(min(max(int(1.5 * vmem_need), 16 << 20), int(0.85 * vmem_cap)))

    flops = 2 * mp * sum(wt.shape[0] * wt.shape[1] for wt, _ in padded_params)
    bytes_accessed = 4 * (mp * K + mp * n_last_p) + weight_bytes
    cost = pl.CostEstimate(flops=flops, transcendentals=0,
                           bytes_accessed=bytes_accessed)

    kernel = functools.partial(_mlp_fused_kernel, num_layers=num_layers)
    yp = pl.pallas_call(
        kernel,
        out_shape=jax.ShapeDtypeStruct((mp, n_last_p), x.dtype),
        grid=grid,
        in_specs=in_specs,
        out_specs=out_specs,
        compiler_params=pltpu.CompilerParams(
            dimension_semantics=("parallel",),
            vmem_limit_bytes=vmem_limit,
        ),
        cost_estimate=cost,
    )(*flat_inputs)

    if mp != M or n_last_p != out_features:
        yp = yp[:M, :out_features]
    return yp


# ----------------------------------------------------------------------------
# Tiled fallback: per-layer matmul with a K reduction grid axis, used when the
# resident padded weights would not comfortably fit this chip's VMEM.
# ----------------------------------------------------------------------------
def _linear_tiled_kernel(x_ref, w_ref, b_ref, o_ref, acc_ref, *, apply_relu):
    @pl.when(pl.program_id(2) == 0)
    def _():
        acc_ref[...] = jnp.zeros_like(acc_ref)

    acc_ref[...] += jnp.dot(x_ref[...], w_ref[...],
                            preferred_element_type=jnp.float32)

    @pl.when(pl.program_id(2) == pl.num_programs(2) - 1)
    def _():
        h = acc_ref[...] + b_ref[...]
        if apply_relu:
            h = jnp.maximum(h, 0.0)
        o_ref[...] = h.astype(o_ref.dtype)


def _linear_tiled(h, wt, b, *, apply_relu, tm, vmem_cap):
    mp, kdim = h.shape
    _, ndim = wt.shape
    tk = _pick_kn_tile(kdim)
    tn = _pick_kn_tile(ndim)
    grid = (mp // tm, ndim // tn, kdim // tk)

    vmem_need = 4 * (2 * (tm * tk + tk * tn + tn + tm * tn) + tm * tn)
    vmem_limit = int(min(max(2 * vmem_need, 32 << 20), int(0.85 * vmem_cap)))
    cost = pl.CostEstimate(
        flops=2 * mp * kdim * ndim, transcendentals=0,
        bytes_accessed=4 * (mp * kdim + kdim * ndim + ndim + mp * ndim))

    kernel = functools.partial(_linear_tiled_kernel, apply_relu=apply_relu)
    return pl.pallas_call(
        kernel,
        out_shape=jax.ShapeDtypeStruct((mp, ndim), h.dtype),
        grid=grid,
        in_specs=[
            pl.BlockSpec((tm, tk), lambda i, j, k: (i, k)),
            pl.BlockSpec((tk, tn), lambda i, j, k: (k, j)),
            pl.BlockSpec((1, tn), lambda i, j, k: (0, j)),
        ],
        out_specs=pl.BlockSpec((tm, tn), lambda i, j, k: (i, j)),
        scratch_shapes=[pltpu.VMEM((tm, tn), jnp.float32)],
        compiler_params=pltpu.CompilerParams(
            dimension_semantics=("parallel", "parallel", "arbitrary"),
            vmem_limit_bytes=vmem_limit,
        ),
        cost_estimate=cost,
    )(h, wt, b)


def _mlp_forward_tiled(x, padded_params, out_features):
    M, K = x.shape
    vmem_cap = _vmem_capacity_bytes()
    n_last_p = padded_params[-1][0].shape[1]

    # Streamed bytes/row with <=256-wide K/N tiles (x, w, out tiles + acc).
    row_bytes = 4 * 5 * 256
    tm = _pick_tm(M, row_bytes, int(0.5 * vmem_cap))
    mp = _round_up(M, tm)
    h = x if mp == M else jnp.zeros((mp, K), x.dtype).at[:M, :].set(x)

    num_layers = len(padded_params)
    for i, (wt, b) in enumerate(padded_params):
        h = _linear_tiled(h, wt, b, apply_relu=(i != num_layers - 1),
                          tm=tm, vmem_cap=vmem_cap)

    if mp != M or n_last_p != out_features:
        h = h[:M, :out_features]
    return h


# ----------------------------------------------------------------------------
# Public API
# ----------------------------------------------------------------------------
def init_mlp_params(key, sizes):
    """Deterministic init matching nn.Linear defaults: U(-1/sqrt(fan_in), +)."""
    params = []
    for fan_in, fan_out in zip(sizes[:-1], sizes[1:]):
        key, kw, kb = jax.random.split(key, 3)
        bound = 1.0 / (fan_in ** 0.5)
        w = jax.random.uniform(kw, (fan_out, fan_in), jnp.float32, -bound, bound)
        b = jax.random.uniform(kb, (fan_out,), jnp.float32, -bound, bound)
        params.append((w, b))
    return params


def prepare_params(params):
    """One-time (init-time) glue: transpose nn.Linear weights (N,K)->(K,N),
    zero-pad N dims (and K dims of layers > 0) up to multiples of 128 so the
    kernel is lane-dense.  Layer 0 keeps its original K so x needs no K pad.
    Zero padding is exact: padded weight rows/cols and biases are 0, ReLU(0)=0."""
    padded = []
    for i, (w, b) in enumerate(params):
        n, k = w.shape
        kp = k if i == 0 else _round_up(k, LANE)
        np_ = _round_up(n, LANE)
        wt = jnp.zeros((kp, np_), jnp.float32).at[:k, :n].set(w.T)
        bp = jnp.zeros((1, np_), jnp.float32).at[0, :n].set(b)
        padded.append((wt, bp))
    return padded


@functools.partial(jax.jit, static_argnums=(2,))
def mlp_forward(x, padded_params, out_features):
    """MLP forward.  Fused single-kernel path when the padded weights fit
    comfortably in this chip's VMEM; tiled per-layer path otherwise."""
    vmem_cap = _vmem_capacity_bytes()
    weight_bytes = 4 * sum(wt.size + b.size for wt, b in padded_params)
    if weight_bytes > 0.4 * vmem_cap:
        return _mlp_forward_tiled(x, padded_params, out_features)
    return _mlp_forward_fused(x, padded_params, out_features)


def mlp_forward_ref(x, params):
    n = len(params)
    for i, (w, b) in enumerate(params):
        if i != n - 1:
            x = jnp.maximum(x @ w.T + b, 0.0)
    w, b = params[-1]
    return x @ w.T + b


if __name__ == "__main__":
    sizes = (16, 32, 32, 8)          # MLP(16, 32, 32, 8)
    batch = 8

    key = jax.random.PRNGKey(0)
    key, kx = jax.random.split(key)
    x = jax.random.normal(kx, (batch, sizes[0]), jnp.float32)

    params = init_mlp_params(key, sizes)          # PyTorch-layout (N, K) weights
    padded_params = prepare_params(params)        # one-time transpose + lane-pad

    ref = mlp_forward_ref(x, params)

    # Auto-dispatch path (fused for these sizes).
    out = jax.block_until_ready(mlp_forward(x, padded_params, sizes[-1]))
    assert out.shape == (batch, sizes[-1])
    assert jnp.allclose(out, ref, atol=1e-5, rtol=1e-5)

    # Also exercise the tiled fallback (used automatically when the resident
    # weights would exceed ~0.4x of this chip's VMEM) to keep it validated.
    tiled_fn = jax.jit(_mlp_forward_tiled, static_argnums=(2,))
    out_t = jax.block_until_ready(tiled_fn(x, padded_params, sizes[-1]))
    assert out_t.shape == (batch, sizes[-1])
    assert jnp.allclose(out_t, ref, atol=1e-5, rtol=1e-5)

    print("KERNEL_OK")
</pallas_src>

<mosaic_0001>
module attributes {stable_mosaic.version = 11 : i64} {
  func.func @_mlp_fused_kernel(%arg0: i32, %arg1: memref<8x16xf32, #tpu.memory_space<vmem>>, %arg2: memref<16x128xf32, #tpu.memory_space<vmem>>, %arg3: memref<1x128xf32, #tpu.memory_space<vmem>>, %arg4: memref<128x128xf32, #tpu.memory_space<vmem>>, %arg5: memref<1x128xf32, #tpu.memory_space<vmem>>, %arg6: memref<128x128xf32, #tpu.memory_space<vmem>>, %arg7: memref<1x128xf32, #tpu.memory_space<vmem>>, %arg8: memref<8x128xf32, #tpu.memory_space<vmem>>) attributes {dimension_semantics = [#tpu.dimension_semantics<parallel>], iteration_bounds = array<i64: 1>, scalar_prefetch = 0 : i64, scratch_operands = 0 : i64, tpu.core_type = #tpu.core_type<tc>, window_params = [{transform_indices = @transform_0, window_bounds = array<i64: 8, 16>}, {pipeline_mode = #tpu.pipeline_mode<synchronous>, transform_indices = @transform_1, window_bounds = array<i64: 16, 128>}, {pipeline_mode = #tpu.pipeline_mode<synchronous>, transform_indices = @transform_2, window_bounds = array<i64: 1, 128>}, {pipeline_mode = #tpu.pipeline_mode<synchronous>, transform_indices = @transform_3, window_bounds = array<i64: 128, 128>}, {pipeline_mode = #tpu.pipeline_mode<synchronous>, transform_indices = @transform_4, window_bounds = array<i64: 1, 128>}, {pipeline_mode = #tpu.pipeline_mode<synchronous>, transform_indices = @transform_5, window_bounds = array<i64: 128, 128>}, {pipeline_mode = #tpu.pipeline_mode<synchronous>, transform_indices = @transform_6, window_bounds = array<i64: 1, 128>}, {transform_indices = @transform_7, window_bounds = array<i64: 8, 128>}]} {
    %c0 = arith.constant 0 : index
    %c0_0 = arith.constant 0 : index
    %0 = vector.load %arg1[%c0, %c0_0] : memref<8x16xf32, #tpu.memory_space<vmem>>, vector<8x16xf32>
    %c0_1 = arith.constant 0 : index
    %c0_2 = arith.constant 0 : index
    %1 = vector.load %arg2[%c0_1, %c0_2] : memref<16x128xf32, #tpu.memory_space<vmem>>, vector<16x128xf32>
    %c0_3 = arith.constant 0 : index
    %c0_4 = arith.constant 0 : index
    %2 = vector.load %arg3[%c0_3, %c0_4] : memref<1x128xf32, #tpu.memory_space<vmem>>, vector<1x128xf32>
    %cst = arith.constant dense<0.000000e+00> : vector<8x128xf32>
    %3 = tpu.matmul %0, %1, %cst {dimension_numbers = #tpu.dot_dimension_numbers<[1], [0], [0], [1], [0, 0, 1, 1], [], []>} : vector<8x16xf32>, vector<16x128xf32>, vector<8x128xf32> -> vector<8x128xf32>
    %4 = vector.broadcast %2 : vector<1x128xf32> to vector<8x128xf32>
    %5 = arith.addf %3, %4 : vector<8x128xf32>
    %cst_5 = arith.constant 0.000000e+00 : f32
    %6 = vector.broadcast %cst_5 : f32 to vector<8x128xf32>
    %7 = arith.maximumf %5, %6 : vector<8x128xf32>
    %c0_6 = arith.constant 0 : index
    %c0_7 = arith.constant 0 : index
    %8 = vector.load %arg4[%c0_6, %c0_7] : memref<128x128xf32, #tpu.memory_space<vmem>>, vector<128x128xf32>
    %c0_8 = arith.constant 0 : index
    %c0_9 = arith.constant 0 : index
    %9 = vector.load %arg5[%c0_8, %c0_9] : memref<1x128xf32, #tpu.memory_space<vmem>>, vector<1x128xf32>
    %cst_10 = arith.constant dense<0.000000e+00> : vector<8x128xf32>
    %10 = tpu.matmul %7, %8, %cst_10 {dimension_numbers = #tpu.dot_dimension_numbers<[1], [0], [0], [1], [0, 0, 1, 1], [], []>} : vector<8x128xf32>, vector<128x128xf32>, vector<8x128xf32> -> vector<8x128xf32>
    %11 = vector.broadcast %9 : vector<1x128xf32> to vector<8x128xf32>
    %12 = arith.addf %10, %11 : vector<8x128xf32>
    %cst_11 = arith.constant 0.000000e+00 : f32
    %13 = vector.broadcast %cst_11 : f32 to vector<8x128xf32>
    %14 = arith.maximumf %12, %13 : vector<8x128xf32>
    %c0_12 = arith.constant 0 : index
    %c0_13 = arith.constant 0 : index
    %15 = vector.load %arg6[%c0_12, %c0_13] : memref<128x128xf32, #tpu.memory_space<vmem>>, vector<128x128xf32>
    %c0_14 = arith.constant 0 : index
    %c0_15 = arith.constant 0 : index
    %16 = vector.load %arg7[%c0_14, %c0_15] : memref<1x128xf32, #tpu.memory_space<vmem>>, vector<1x128xf32>
    %cst_16 = arith.constant dense<0.000000e+00> : vector<8x128xf32>
    %17 = tpu.matmul %14, %15, %cst_16 {dimension_numbers = #tpu.dot_dimension_numbers<[1], [0], [0], [1], [0, 0, 1, 1], [], []>} : vector<8x128xf32>, vector<128x128xf32>, vector<8x128xf32> -> vector<8x128xf32>
    %18 = vector.broadcast %16 : vector<1x128xf32> to vector<8x128xf32>
    %19 = arith.addf %17, %18 : vector<8x128xf32>
    %c0_17 = arith.constant 0 : index
    %c0_18 = arith.constant 0 : index
    %20 = vector.load %arg8[%c0_17, %c0_18] : memref<8x128xf32, #tpu.memory_space<vmem>>, vector<8x128xf32>
    tpu.vector_store %arg8[%c0_17, %c0_18], %19 {strides = array<i32>} : memref<8x128xf32, #tpu.memory_space<vmem>>, vector<8x128xf32>,
    return
  }
  func.func @transform_0(%arg0: i32) -> (i32, i32) {
    %c0_i32 = arith.constant 0 : i32
    %c0_i32_0 = arith.constant 0 : i32
    return %arg0, %c0_i32 : i32, i32
  }
  func.func @transform_1(%arg0: i32) -> (i32, i32) {
    %c0_i32 = arith.constant 0 : i32
    %c0_i32_0 = arith.constant 0 : i32
    %c0_i32_1 = arith.constant 0 : i32
    return %c0_i32, %c0_i32_0 : i32, i32
  }
  func.func @transform_2(%arg0: i32) -> (i32, i32) {
    %c0_i32 = arith.constant 0 : i32
    %c0_i32_0 = arith.constant 0 : i32
    %c0_i32_1 = arith.constant 0 : i32
    return %c0_i32, %c0_i32_0 : i32, i32
  }
  func.func @transform_3(%arg0: i32) -> (i32, i32) {
    %c0_i32 = arith.constant 0 : i32
    %c0_i32_0 = arith.constant 0 : i32
    %c0_i32_1 = arith.constant 0 : i32
    return %c0_i32, %c0_i32_0 : i32, i32
  }
  func.func @transform_4(%arg0: i32) -> (i32, i32) {
    %c0_i32 = arith.constant 0 : i32
    %c0_i32_0 = arith.constant 0 : i32
    %c0_i32_1 = arith.constant 0 : i32
    return %c0_i32, %c0_i32_0 : i32, i32
  }
  func.func @transform_5(%arg0: i32) -> (i32, i32) {
    %c0_i32 = arith.constant 0 : i32
    %c0_i32_0 = arith.constant 0 : i32
    %c0_i32_1 = arith.constant 0 : i32
    return %c0_i32, %c0_i32_0 : i32, i32
  }
  func.func @transform_6(%arg0: i32) -> (i32, i32) {
    %c0_i32 = arith.constant 0 : i32
    %c0_i32_0 = arith.constant 0 : i32
    %c0_i32_1 = arith.constant 0 : i32
    return %c0_i32, %c0_i32_0 : i32, i32
  }
  func.func @transform_7(%arg0: i32) -> (i32, i32) {
    %c0_i32 = arith.constant 0 : i32
    %c0_i32_0 = arith.constant 0 : i32
    return %arg0, %c0_i32 : i32, i32
  }
}

</mosaic_0001>

<llo_original>
// kernel: mlp_forward.1
$region0: #{mlp_forward.1}
  #allocation0 [shape = 'u32[]', space=smem, size = 0x4, offset = 0x4, fixed_abs, tag = 'smem constant byte address 0x4 - core index']
  #allocation1 [shape = 'u32[144,128]{1,0:T(1,128)}', space=vmem, size = 0x12000, scoped, tag = 'internal scratch']
  %s0 = inlined_call_operand.hbm [shape: f32[8,16], index: 0, kind: input, shape index: {}]
  %s1 = inlined_call_operand.hbm [shape: f32[16,128], index: 1, kind: input, shape index: {}]
  %s2 = inlined_call_operand.vmem [shape: f32[1,128], index: 2, kind: input, shape index: {}]
  %s3 = inlined_call_operand.hbm [shape: f32[128,128], index: 3, kind: input, shape index: {}]
  %s4 = inlined_call_operand.vmem [shape: f32[1,128], index: 4, kind: input, shape index: {}]
  %s5 = inlined_call_operand.hbm [shape: f32[128,128], index: 5, kind: input, shape index: {}]
  %s6 = inlined_call_operand.vmem [shape: f32[1,128], index: 6, kind: input, shape index: {}]
  %s7 = inlined_call_operand.hbm [shape: f32[8,128], index: 7, kind: output, shape index: {}]
  %s8 = sld [smem:[#allocation0]]
  $region54: #{mlp_forward.1} parent=0
    _
  %s10 = ssub.s32 1, %s8
  %s11 = scalar_select 0, %s10, %s8
  $region1: #{mlp_forward.1} parent=0
    #allocation2 [shape = 'u8[4096]{0}', space=vmem, size = 0x1000, scoped, tag = 'input window, operand 0, single buffered']
    #allocation3 [shape = 's32[1]{0}', space=sflag, size = 0x4, scoped, tag = 'scoped memory for mlp_forward.1']
    #allocation4 [shape = 's32[1]{0}', space=sflag, size = 0x4, scoped, tag = 'scoped memory for mlp_forward.1']
    #allocation5 [shape = 'u8[8192]{0}', space=vmem, size = 0x2000, scoped, tag = 'input window, operand 1, single buffered']
    #allocation6 [shape = 's32[1]{0}', space=sflag, size = 0x4, scoped, tag = 'scoped memory for mlp_forward.1']
    #allocation7 [shape = 'u8[65536]{0}', space=vmem, size = 0x10000, scoped, tag = 'input window, operand 3, single buffered']
    #allocation8 [shape = 'u8[65536]{0}', space=vmem, size = 0x10000, scoped, tag = 'input window, operand 5, single buffered']
    #allocation9 [shape = 's32[1]{0}', space=sflag, size = 0x4, scoped, tag = 'scoped memory for mlp_forward.1']
    #allocation10 [shape = 'u8[4096]{0}', space=vmem, size = 0x1000, scoped, tag = 'output window, operand 0, single buffered']
    %12 = vsyncpa [#allocation3], 0
    %13 = vsyncpa [#allocation6], 0
    %14 = vsyncpa [#allocation9], 0
    %15 = vsyncpa [#allocation4], 0
    // Predicated region
    $region2: #{mlp_forward.1} parent=1 // pred_check
      _
    $region3: #{mlp_forward.1} parent=1 // pred_check_branch
      %17 = sbr.rel (0) target = $region5
    $region4: #{mlp_forward.1} parent=1 // pred_region
      %s19 = ssub.s32 128, 128
      %20 = vsyncadd [#allocation3], %s19
      %s22 = sshll.u32 [#allocation2], 4
      %s23 = int_to_ptr.vmem [resolvable:$true] %s22
      %25 = dma.hbm_to_vmem [thread:$0]  %s0, 128, %s23, [#allocation3]
    $region5: #{mlp_forward.1} parent=1 // pred_fallthru
      _
    // Predicated region
    $region6: #{mlp_forward.1} parent=1 // pred_check
      _
    $region7: #{mlp_forward.1} parent=1 // pred_check_branch
      %27 = sbr.rel (0) target = $region9
    $region8: #{mlp_forward.1} parent=1 // pred_region
      %s29 = ssub.s32 256, 256
      %30 = vsyncadd [#allocation6], %s29
      %s31 = sshll.u32 [#allocation5], 4
      %s32 = int_to_ptr.vmem [resolvable:$true] %s31
      %37 = dma.hbm_to_vmem [thread:$0]  %s1, 256, %s32, [#allocation6], 128, 128, 8
    $region9: #{mlp_forward.1} parent=1 // pred_fallthru
      _
    // Predicated region
    $region10: #{mlp_forward.1} parent=1 // pred_check
      _
    $region11: #{mlp_forward.1} parent=1 // pred_check_branch
      %39 = sbr.rel (0) target = $region13
    $region12: #{mlp_forward.1} parent=1 // pred_region
      _
    $region13: #{mlp_forward.1} parent=1 // pred_fallthru
      _
    // Predicated region
    $region14: #{mlp_forward.1} parent=1 // pred_check
      _
    $region15: #{mlp_forward.1} parent=1 // pred_check_branch
      %41 = sbr.rel (0) target = $region17
    $region16: #{mlp_forward.1} parent=1 // pred_region
      %s43 = ssub.s32 2048, 2048
      %44 = vsyncadd [#allocation6], %s43
      %s45 = sshll.u32 [#allocation7], 4
      %s46 = int_to_ptr.vmem [resolvable:$true] %s45
      %51 = dma.hbm_to_vmem [thread:$0]  %s3, 2048, %s46, [#allocation6], 128, 128, 8
    $region17: #{mlp_forward.1} parent=1 // pred_fallthru
      _
    // Predicated region
    $region18: #{mlp_forward.1} parent=1 // pred_check
      _
    $region19: #{mlp_forward.1} parent=1 // pred_check_branch
      %53 = sbr.rel (0) target = $region21
    $region20: #{mlp_forward.1} parent=1 // pred_region
      _
    $region21: #{mlp_forward.1} parent=1 // pred_fallthru
      _
    // Predicated region
    $region22: #{mlp_forward.1} parent=1 // pred_check
      _
    $region23: #{mlp_forward.1} parent=1 // pred_check_branch
      %55 = sbr.rel (0) target = $region25
    $region24: #{mlp_forward.1} parent=1 // pred_region
      %s57 = ssub.s32 2048, 2048
      %58 = vsyncadd [#allocation9], %s57
      %s59 = sshll.u32 [#allocation8], 4
      %s60 = int_to_ptr.vmem [resolvable:$true] %s59
      %65 = dma.hbm_to_vmem [thread:$0]  %s5, 2048, %s60, [#allocation9], 128, 128, 8
    $region25: #{mlp_forward.1} parent=1 // pred_fallthru
      _
    // Predicated region
    $region26: #{mlp_forward.1} parent=1 // pred_check
      _
    $region27: #{mlp_forward.1} parent=1 // pred_check_branch
      %67 = sbr.rel (0) target = $region29
    $region28: #{mlp_forward.1} parent=1 // pred_region
      _
    $region29: #{mlp_forward.1} parent=1 // pred_fallthru
      _
    // Predicated region
    $region30: #{mlp_forward.1} parent=1 // pred_check
      _
    $region31: #{mlp_forward.1} parent=1 // pred_check_branch
      %69 = sbr.rel (0) target = $region33
    $region32: #{mlp_forward.1} parent=1 // pred_region
      %70 = dma.done [#allocation3], 128
    $region33: #{mlp_forward.1} parent=1 // pred_fallthru
      _
    // Predicated region
    $region34: #{mlp_forward.1} parent=1 // pred_check
      _
    $region35: #{mlp_forward.1} parent=1 // pred_check_branch
      %72 = sbr.rel (0) target = $region37
    $region36: #{mlp_forward.1} parent=1 // pred_region
      %73 = dma.done [#allocation6], 256
    $region37: #{mlp_forward.1} parent=1 // pred_fallthru
      _
    // Predicated region
    $region38: #{mlp_forward.1} parent=1 // pred_check
      _
    $region39: #{mlp_forward.1} parent=1 // pred_check_branch
      %75 = sbr.rel (0) target = $region41
    $region40: #{mlp_forward.1} parent=1 // pred_region
      %76 = dma.done [#allocation6], 2048
    $region41: #{mlp_forward.1} parent=1 // pred_fallthru
      _
    // Predicated region
    $region42: #{mlp_forward.1} parent=1 // pred_check
      _
    $region43: #{mlp_forward.1} parent=1 // pred_check_branch
      %78 = sbr.rel (0) target = $region45
    $region44: #{mlp_forward.1} parent=1 // pred_region
      %79 = dma.done [#allocation9], 2048
    $region45: #{mlp_forward.1} parent=1 // pred_fallthru
      _
    %v80 = vld [vmem:[#allocation2] sm:$0xff]
    %v81 = vld [vmem:[#allocation5] sm:$0xff]
    %v82 = vld [vmem:[#allocation5 + $0x8] sm:$0xff]
    %v83 = vld [vmem:[%s2] sm:$0x1]
    %v85 = vlaneseq
    %v86 = vshrl.u32 %v85, 7
    %v87 = vsub.s32 0, %v86
    %v88 = vrot.slane %v83, %v87
    %vm90 = vcmask 130048
    %v92 = vsel %vm90, %v80, 0
    %94 = vmatprep.subr.mxu0 0.0
    %95 = vmatpush1.msra.mxu0 0.0
    %96 = vmatprep.subr.mxu0 0.0
    %97 = vmatpush1.msra.mxu0 0.0
    %98 = vmatprep.subr.mxu0 0.0
    %99 = vmatpush1.msra.mxu0 0.0
    %100 = vmatprep.subr.mxu0 0.0
    %101 = vmatpush1.msra.mxu0 0.0
    %102 = vmatprep.subr.mxu0 0.0
    %103 = vmatpush1.msra.mxu0 0.0
    %104 = vmatprep.subr.mxu0 0.0
    %105 = vmatpush1.msra.mxu0 0.0
    %106 = vmatprep.subr.mxu0 0.0
    %107 = vmatpush1.msra.mxu0 0.0
    %108 = vmatprep.subr.mxu0 0.0
    %109 = vmatpush1.msra.mxu0 0.0
    %110 = vmatprep.subr.mxu0 0.0
    %111 = vmatpush1.msra.mxu0 0.0
    %112 = vmatprep.subr.mxu0 0.0
    %113 = vmatpush1.msra.mxu0 0.0
    %114 = vmatprep.subr.mxu0 0.0
    %115 = vmatpush1.msra.mxu0 0.0
    %116 = vmatprep.subr.mxu0 0.0
    %117 = vmatpush1.msra.mxu0 0.0
    %118 = vmatprep.subr.mxu0 0.0
    %119 = vmatpush1.msra.mxu0 0.0
    %120 = vmatprep.subr.mxu0 0.0
    %121 = vmatpush1.msra.mxu0 0.0
    %122 = vmatprep.subr.mxu0 0.0
    %123 = vmatpush1.msra.mxu0 %v82
    %124 = vmatprep.subr.mxu0 0.0
    %125 = vmatpush1.msra.mxu0 %v81
    %126 = vmatprep.subr.mxu0 0.0
    %127 = vmatpush2.msra.mxu0 0.0
    %128 = vmatprep.subr.mxu0 0.0
    %129 = vmatpush2.msra.mxu0 0.0
    %130 = vmatprep.subr.mxu0 0.0
    %131 = vmatpush2.msra.mxu0 0.0
    %132 = vmatprep.subr.mxu0 0.0
    %133 = vmatpush2.msra.mxu0 0.0
    %134 = vmatprep.subr.mxu0 0.0
    %135 = vmatpush2.msra.mxu0 0.0
    %136 = vmatprep.subr.mxu0 0.0
    %137 = vmatpush2.msra.mxu0 0.0
    %138 = vmatprep.subr.mxu0 0.0
    %139 = vmatpush2.msra.mxu0 0.0
    %140 = vmatprep.subr.mxu0 0.0
    %141 = vmatpush2.msra.mxu0 0.0
    %142 = vmatprep.subr.mxu0 0.0
    %143 = vmatpush2.msra.mxu0 0.0
    %144 = vmatprep.subr.mxu0 0.0
    %145 = vmatpush2.msra.mxu0 0.0
    %146 = vmatprep.subr.mxu0 0.0
    %147 = vmatpush2.msra.mxu0 0.0
    %148 = vmatprep.subr.mxu0 0.0
    %149 = vmatpush2.msra.mxu0 0.0
    %150 = vmatprep.subr.mxu0 0.0
    %151 = vmatpush2.msra.mxu0 0.0
    %152 = vmatprep.subr.mxu0 0.0
    %153 = vmatpush2.msra.mxu0 0.0
    %154 = vmatprep.subr.mxu0 0.0
    %155 = vmatpush2.msra.mxu0 0.0
    %156 = vmatprep.subr.mxu0 0.0
    %157 = vmatpush2.msra.mxu0 0.0
    %158 = vmatprep.mubr.f32.mxu0 0.0
    %159 = vmatmul.mubr.f32.gmra.mxu0 %v92
    %v160 = vpop.f32.mrf.mxu0
    %v161 = vadd.f32 %v88, %v160
    %v162 = vpop.f32.mrf.mxu0
    %163 = vdwg.mxu0
    %v164 = vmax.f32 %v161, 0.0
    %v165 = vld [vmem:[#allocation7] sm:$0xff]
    %v166 = vld [vmem:[#allocation7 + $0x8] sm:$0xff]
    %v167 = vld [vmem:[#allocation7 + $0x10] sm:$0xff]
    %v168 = vld [vmem:[#allocation7 + $0x18] sm:$0xff]
    %v169 = vld [vmem:[#allocation7 + $0x20] sm:$0xff]
    %v170 = vld [vmem:[#allocation7 + $0x28] sm:$0xff]
    %v171 = vld [vmem:[#allocation7 + $0x30] sm:$0xff]
    %v172 = vld [vmem:[#allocation7 + $0x38] sm:$0xff]
    %v173 = vld [vmem:[#allocation7 + $0x40] sm:$0xff]
    %v174 = vld [vmem:[#allocation7 + $0x48] sm:$0xff]
    %v175 = vld [vmem:[#allocation7 + $0x50] sm:$0xff]
    %v176 = vld [vmem:[#allocation7 + $0x58] sm:$0xff]
    %v177 = vld [vmem:[#allocation7 + $0x60] sm:$0xff]
    %v178 = vld [vmem:[#allocation7 + $0x68] sm:$0xff]
    %v179 = vld [vmem:[#allocation7 + $0x70] sm:$0xff]
    %v180 = vld [vmem:[#allocation7 + $0x78] sm:$0xff]
    %v181 = vld [vmem:[%s4] sm:$0x1]
    %v183 = vlaneseq
    %v184 = vshrl.u32 %v183, 7
    %v185 = vsub.s32 0, %v184
    %v186 = vrot.slane %v181, %v185
    %188 = vmatprep.subr.mxu0 0.0
    %189 = vmatpush1.msra.mxu0 %v180
    %190 = vmatprep.subr.mxu0 0.0
    %191 = vmatpush1.msra.mxu0 %v179
    %192 = vmatprep.subr.mxu0 0.0
    %193 = vmatpush1.msra.mxu0 %v178
    %194 = vmatprep.subr.mxu0 0.0
    %195 = vmatpush1.msra.mxu0 %v177
    %196 = vmatprep.subr.mxu0 0.0
    %197 = vmatpush1.msra.mxu0 %v176
    %198 = vmatprep.subr.mxu0 0.0
    %199 = vmatpush1.msra.mxu0 %v175
    %200 = vmatprep.subr.mxu0 0.0
    %201 = vmatpush1.msra.mxu0 %v174
    %202 = vmatprep.subr.mxu0 0.0
    %203 = vmatpush1.msra.mxu0 %v173
    %204 = vmatprep.subr.mxu0 0.0
    %205 = vmatpush1.msra.mxu0 %v172
    %206 = vmatprep.subr.mxu0 0.0
    %207 = vmatpush1.msra.mxu0 %v171
    %208 = vmatprep.subr.mxu0 0.0
    %209 = vmatpush1.msra.mxu0 %v170
    %210 = vmatprep.subr.mxu0 0.0
    %211 = vmatpush1.msra.mxu0 %v169
    %212 = vmatprep.subr.mxu0 0.0
    %213 = vmatpush1.msra.mxu0 %v168
    %214 = vmatprep.subr.mxu0 0.0
    %215 = vmatpush1.msra.mxu0 %v167
    %216 = vmatprep.subr.mxu0 0.0
    %217 = vmatpush1.msra.mxu0 %v166
    %218 = vmatprep.subr.mxu0 0.0
    %219 = vmatpush1.msra.mxu0 %v165
    %220 = vmatprep.subr.mxu0 0.0
    %221 = vmatpush2.msra.mxu0 0.0
    %222 = vmatprep.subr.mxu0 0.0
    %223 = vmatpush2.msra.mxu0 0.0
    %224 = vmatprep.subr.mxu0 0.0
    %225 = vmatpush2.msra.mxu0 0.0
    %226 = vmatprep.subr.mxu0 0.0
    %227 = vmatpush2.msra.mxu0 0.0
    %228 = vmatprep.subr.mxu0 0.0
    %229 = vmatpush2.msra.mxu0 0.0
    %230 = vmatprep.subr.mxu0 0.0
    %231 = vmatpush2.msra.mxu0 0.0
    %232 = vmatprep.subr.mxu0 0.0
    %233 = vmatpush2.msra.mxu0 0.0
    %234 = vmatprep.subr.mxu0 0.0
    %235 = vmatpush2.msra.mxu0 0.0
    %236 = vmatprep.subr.mxu0 0.0
    %237 = vmatpush2.msra.mxu0 0.0
    %238 = vmatprep.subr.mxu0 0.0
    %239 = vmatpush2.msra.mxu0 0.0
    %240 = vmatprep.subr.mxu0 0.0
    %241 = vmatpush2.msra.mxu0 0.0
    %242 = vmatprep.subr.mxu0 0.0
    %243 = vmatpush2.msra.mxu0 0.0
    %244 = vmatprep.subr.mxu0 0.0
    %245 = vmatpush2.msra.mxu0 0.0
    %246 = vmatprep.subr.mxu0 0.0
    %247 = vmatpush2.msra.mxu0 0.0
    %248 = vmatprep.subr.mxu0 0.0
    %249 = vmatpush2.msra.mxu0 0.0
    %250 = vmatprep.subr.mxu0 0.0
    %251 = vmatpush2.msra.mxu0 0.0
    %252 = vmatprep.mubr.f32.mxu0 0.0
    %253 = vmatmul.mubr.f32.gmra.mxu0 %v164
    %v254 = vpop.f32.mrf.mxu0
    %v255 = vadd.f32 %v186, %v254
    %v256 = vpop.f32.mrf.mxu0
    %257 = vdwg.mxu0
    %v258 = vmax.f32 %v255, 0.0
    %v259 = vld [vmem:[#allocation8] sm:$0xff]
    %v260 = vld [vmem:[#allocation8 + $0x8] sm:$0xff]
    %v261 = vld [vmem:[#allocation8 + $0x10] sm:$0xff]
    %v262 = vld [vmem:[#allocation8 + $0x18] sm:$0xff]
    %v263 = vld [vmem:[#allocation8 + $0x20] sm:$0xff]
    %v264 = vld [vmem:[#allocation8 + $0x28] sm:$0xff]
    %v265 = vld [vmem:[#allocation8 + $0x30] sm:$0xff]
    %v266 = vld [vmem:[#allocation8 + $0x38] sm:$0xff]
    %v267 = vld [vmem:[#allocation8 + $0x40] sm:$0xff]
    %v268 = vld [vmem:[#allocation8 + $0x48] sm:$0xff]
    %v269 = vld [vmem:[#allocation8 + $0x50] sm:$0xff]
    %v270 = vld [vmem:[#allocation8 + $0x58] sm:$0xff]
    %v271 = vld [vmem:[#allocation8 + $0x60] sm:$0xff]
    %v272 = vld [vmem:[#allocation8 + $0x68] sm:$0xff]
    %v273 = vld [vmem:[#allocation8 + $0x70] sm:$0xff]
    %v274 = vld [vmem:[#allocation8 + $0x78] sm:$0xff]
    %v275 = vld [vmem:[%s6] sm:$0x1]
    %v277 = vlaneseq
    %v278 = vshrl.u32 %v277, 7
    %v279 = vsub.s32 0, %v278
    %v280 = vrot.slane %v275, %v279
    %282 = vmatprep.subr.mxu0 0.0
    %283 = vmatpush1.msra.mxu0 %v274
    %284 = vmatprep.subr.mxu0 0.0
    %285 = vmatpush1.msra.mxu0 %v273
    %286 = vmatprep.subr.mxu0 0.0
    %287 = vmatpush1.msra.mxu0 %v272
    %288 = vmatprep.subr.mxu0 0.0
    %289 = vmatpush1.msra.mxu0 %v271
    %290 = vmatprep.subr.mxu0 0.0
    %291 = vmatpush1.msra.mxu0 %v270
    %292 = vmatprep.subr.mxu0 0.0
    %293 = vmatpush1.msra.mxu0 %v269
    %294 = vmatprep.subr.mxu0 0.0
    %295 = vmatpush1.msra.mxu0 %v268
    %296 = vmatprep.subr.mxu0 0.0
    %297 = vmatpush1.msra.mxu0 %v267
    %298 = vmatprep.subr.mxu0 0.0
    %299 = vmatpush1.msra.mxu0 %v266
    %300 = vmatprep.subr.mxu0 0.0
    %301 = vmatpush1.msra.mxu0 %v265
    %302 = vmatprep.subr.mxu0 0.0
    %303 = vmatpush1.msra.mxu0 %v264
    %304 = vmatprep.subr.mxu0 0.0
    %305 = vmatpush1.msra.mxu0 %v263
    %306 = vmatprep.subr.mxu0 0.0
    %307 = vmatpush1.msra.mxu0 %v262
    %308 = vmatprep.subr.mxu0 0.0
    %309 = vmatpush1.msra.mxu0 %v261
    %310 = vmatprep.subr.mxu0 0.0
    %311 = vmatpush1.msra.mxu0 %v260
    %312 = vmatprep.subr.mxu0 0.0
    %313 = vmatpush1.msra.mxu0 %v259
    %314 = vmatprep.subr.mxu0 0.0
    %315 = vmatpush2.msra.mxu0 0.0
    %316 = vmatprep.subr.mxu0 0.0
    %317 = vmatpush2.msra.mxu0 0.0
    %318 = vmatprep.subr.mxu0 0.0
    %319 = vmatpush2.msra.mxu0 0.0
    %320 = vmatprep.subr.mxu0 0.0
    %321 = vmatpush2.msra.mxu0 0.0
    %322 = vmatprep.subr.mxu0 0.0
    %323 = vmatpush2.msra.mxu0 0.0
    %324 = vmatprep.subr.mxu0 0.0
    %325 = vmatpush2.msra.mxu0 0.0
    %326 = vmatprep.subr.mxu0 0.0
    %327 = vmatpush2.msra.mxu0 0.0
    %328 = vmatprep.subr.mxu0 0.0
    %329 = vmatpush2.msra.mxu0 0.0
    %330 = vmatprep.subr.mxu0 0.0
    %331 = vmatpush2.msra.mxu0 0.0
    %332 = vmatprep.subr.mxu0 0.0
    %333 = vmatpush2.msra.mxu0 0.0
    %334 = vmatprep.subr.mxu0 0.0
    %335 = vmatpush2.msra.mxu0 0.0
    %336 = vmatprep.subr.mxu0 0.0
    %337 = vmatpush2.msra.mxu0 0.0
    %338 = vmatprep.subr.mxu0 0.0
    %339 = vmatpush2.msra.mxu0 0.0
    %340 = vmatprep.subr.mxu0 0.0
    %341 = vmatpush2.msra.mxu0 0.0
    %342 = vmatprep.subr.mxu0 0.0
    %343 = vmatpush2.msra.mxu0 0.0
    %344 = vmatprep.subr.mxu0 0.0
    %345 = vmatpush2.msra.mxu0 0.0
    %346 = vmatprep.mubr.f32.mxu0 0.0
    %347 = vmatmul.mubr.f32.gmra.mxu0 %v258
    %v348 = vpop.f32.mrf.mxu0
    %v349 = vadd.f32 %v280, %v348
    %v350 = vpop.f32.mrf.mxu0
    %351 = vdwg.mxu0
    %352 = vst [vmem:[#allocation10] sm:$0xff] %v349
    // Predicated region
    $region46: #{mlp_forward.1} parent=1 // pred_check
      _
    $region47: #{mlp_forward.1} parent=1 // pred_check_branch
      %354 = sbr.rel (0) target = $region49
    $region48: #{mlp_forward.1} parent=1 // pred_region
      %s356 = ssub.s32 128, 128
      %357 = vsyncadd [#allocation4], %s356
      %s359 = sshll.u32 [#allocation10], 4
      %s360 = int_to_ptr.vmem [resolvable:$true] %s359
      %362 = dma.vmem_to_hbm [thread:$0]  %s360, 128, %s7, [#allocation4]
    $region49: #{mlp_forward.1} parent=1 // pred_fallthru
      _
    // Predicated region
    $region50: #{mlp_forward.1} parent=1 // pred_check
      _
    $region51: #{mlp_forward.1} parent=1 // pred_check_branch
      %364 = sbr.rel (0) target = $region53
    $region52: #{mlp_forward.1} parent=1 // pred_region
      %365 = dma.done [#allocation4], 128
    $region53: #{mlp_forward.1} parent=1 // pred_fallthru
      _
    %366 = vsyncpa [#allocation3], 1
    %367 = vsyncpa [#allocation6], 1
    %368 = vsyncpa [#allocation9], 1
    %369 = vsyncpa [#allocation4], 1

</llo_original>
